<compile_context>
chip_gen: v7x
topology: tpu7x:2x2x1
jax: 0.10.0
libtpu: 0.0.40
codegen_flags: <defaults>
</compile_context>

<pallas_src>
import functools

import jax
import jax.numpy as jnp
from jax import lax
from jax.experimental import pallas as pl
from jax.experimental.pallas import tpu as pltpu

_LANE = 128
_TARGET_BLOCK_BYTES = 2 * 1024 * 1024     # ~2 MiB per input per buffer
_VMEM_LIMIT_BYTES = 32 * 1024 * 1024      # raise v5e's 16 MiB scoped default


def _round_up(x, m):
    return ((x + m - 1) // m) * m


def _cdiv(a, b):
    return -(-a // b)


def _num_tensorcores():
    """Best-effort TensorCores-per-chip query; falls back to 1 (v5e/v6e)."""
    try:
        info = pltpu.get_tpu_info()
    except Exception:
        return 1
    for name in ("num_tensorcores", "tensorcores_per_chip", "num_cores",
                 "cores_per_chip", "core_count", "num_cores_per_chip"):
        n = getattr(info, name, None)
        if n is None:
            continue
        try:
            n = int(n)
        except Exception:
            continue
        if n >= 1:
            return min(n, 2)
    return 1


def _l1_sum_kernel(x_ref, y_ref, o_ref, acc_ref, *, ncores, steps, block_rows,
                   rows, need_mask):
    if ncores > 1:
        c = pl.program_id(0)
        s = pl.program_id(1)
    else:
        c = 0
        s = pl.program_id(0)

    @pl.when(s == 0)
    def _():
        acc_ref[...] = jnp.zeros_like(acc_ref)

    # Elementwise |x - y| in f32; cast is free on the VPU, inputs stream in
    # their native dtype (no wrapper-side cast / extra HBM traffic).
    d = jnp.abs(x_ref[...].astype(jnp.float32) - y_ref[...].astype(jnp.float32))
    g = block_rows // 8

    def _accumulate(v):
        # Tile-aligned (groups of 8 sublanes), no-copy reshape followed by a
        # pure-VPU partial reduce into the tiny (8, 128) accumulator.
        acc_ref[...] += jnp.sum(v.reshape(g, 8, _LANE), axis=0)

    if not need_mask:
        _accumulate(d)
    else:
        blk = c * steps + s
        interior = (blk + 1) * block_rows <= rows

        @pl.when(interior)
        def _():
            _accumulate(d)

        @pl.when(jnp.logical_not(interior))
        def _():
            # Partial final block or duplicated (clamped) block: zero out rows
            # past the real array. limit <= 0 masks a duplicated block fully.
            limit = rows - blk * block_rows
            m = lax.broadcasted_iota(jnp.int32, (block_rows, _LANE), 0) < limit
            _accumulate(jnp.where(m, d, 0.0))

    @pl.when(s == steps - 1)
    def _():
        o_ref[...] = acc_ref[...][None]


def flow_supervised_loss(flow, flow_gt, img=None, label=None, h_ori=None,
                         w_ori=None):
    """mean(|flow - flow_gt|); img/label/h_ori/w_ori are ignored (as in PyTorch)."""
    del img, label, h_ori, w_ori
    total = flow.size
    if total == 0:
        # TODO(synk): PyTorch nn.L1Loss on empty tensors returns NaN; we return 0.
        return jnp.float32(0.0)

    fx = flow.reshape(-1)      # free reshape, native dtype
    fy = flow_gt.reshape(-1)

    rows = total // _LANE
    main = rows * _LANE
    tail_sum = jnp.float32(0.0)
    if main != total:
        # Rare ragged-lane case (< 128 trailing elements): plain JAX.
        tail_sum = jnp.sum(jnp.abs(fx[main:].astype(jnp.float32)
                                   - fy[main:].astype(jnp.float32)))
        fx = fx[:main]
        fy = fy[:main]
    if rows == 0:
        return tail_sum / jnp.float32(total)

    x2d = fx.reshape(rows, _LANE)
    y2d = fy.reshape(rows, _LANE)

    # Block geometry: ~2 MiB per input per step, rounded to the dtype's
    # sublane multiple (8 f32 / 16 bf16 / 32 int8).
    itemsize = jnp.dtype(x2d.dtype).itemsize
    sublane = max(8, 32 // max(1, itemsize))
    max_rows = max(sublane,
                   (_TARGET_BLOCK_BYTES // (_LANE * itemsize)) // sublane * sublane)
    block_rows = min(max_rows, _round_up(rows, sublane))

    total_row_blocks = _cdiv(rows, block_rows)
    ncores = _num_tensorcores() if total_row_blocks >= 2 else 1
    ncores = max(1, min(ncores, total_row_blocks))
    steps = _cdiv(total_row_blocks, ncores)
    need_mask = (ncores * steps * block_rows) != rows

    kernel = functools.partial(_l1_sum_kernel, ncores=ncores, steps=steps,
                               block_rows=block_rows, rows=rows,
                               need_mask=need_mask)

    if ncores > 1:
        grid = (ncores, steps)
        if ncores * steps == total_row_blocks:
            in_map = lambda c, s: (c * steps + s, 0)
        else:
            # Clamp duplicated block indices so the DMA stays in bounds; the
            # duplicated block is fully masked to zero inside the kernel.
            in_map = lambda c, s: (jnp.minimum(c * steps + s,
                                               total_row_blocks - 1), 0)
        out_map = lambda c, s: (c, 0, 0)
        dim_sem = (pltpu.CORE_PARALLEL, pltpu.ARBITRARY)
    else:
        grid = (steps,)
        in_map = lambda s: (s, 0)
        out_map = lambda s: (0, 0, 0)
        dim_sem = (pltpu.ARBITRARY,)

    partials = pl.pallas_call(
        kernel,
        out_shape=jax.ShapeDtypeStruct((ncores, 8, _LANE), jnp.float32),
        grid_spec=pltpu.PrefetchScalarGridSpec(
            num_scalar_prefetch=0,
            grid=grid,
            in_specs=[
                pl.BlockSpec((block_rows, _LANE), in_map),
                pl.BlockSpec((block_rows, _LANE), in_map),
            ],
            out_specs=pl.BlockSpec((1, 8, _LANE), out_map),
            scratch_shapes=[pltpu.VMEM((8, _LANE), jnp.float32)],
        ),
        compiler_params=pltpu.CompilerParams(
            dimension_semantics=dim_sem,
            vmem_limit_bytes=_VMEM_LIMIT_BYTES),
    )(x2d, y2d)

    return (jnp.sum(partials) + tail_sum) / jnp.float32(total)


if __name__ == "__main__":
    key = jax.random.PRNGKey(0)
    k1, k2, k3 = jax.random.split(key, 3)
    # Small flow-style NCHW inputs: batch=2, 2 flow channels, 16x16 spatial.
    flow = jax.random.normal(k1, (2, 2, 16, 16), dtype=jnp.float32)
    flow_gt = jax.random.normal(k2, (2, 2, 16, 16), dtype=jnp.float32)
    img = jax.random.normal(k3, (2, 3, 16, 16), dtype=jnp.float32)  # ignored
    label = jnp.zeros((2, 16, 16), dtype=jnp.int32)                 # ignored
    h_ori, w_ori = 64, 64                                           # ignored

    loss = flow_supervised_loss(flow, flow_gt, img, label, h_ori, w_ori)
    loss = jax.block_until_ready(loss)

    ref = jnp.mean(jnp.abs(flow - flow_gt))
    assert jnp.allclose(loss, ref, atol=1e-6, rtol=1e-6), (loss, ref)
    print("KERNEL_OK")
</pallas_src>

<mosaic_0001>
module attributes {stable_mosaic.version = 11 : i64} {
  func.func @_l1_sum_kernel(%arg0: i32, %arg1: memref<8x128xf32, #tpu.memory_space<vmem>>, %arg2: memref<8x128xf32, #tpu.memory_space<vmem>>, %arg3: memref<1x8x128xf32, #tpu.memory_space<vmem>>, %arg4: memref<8x128xf32, #tpu.memory_space<vmem>>) attributes {dimension_semantics = [#tpu.dimension_semantics<arbitrary>], iteration_bounds = array<i64: 1>, scalar_prefetch = 0 : i64, scratch_operands = 1 : i64, tpu.core_type = #tpu.core_type<tc>, window_params = [{transform_indices = @transform_0, window_bounds = array<i64: 8, 128>}, {transform_indices = @transform_1, window_bounds = array<i64: 8, 128>}, {pipeline_mode = #tpu.pipeline_mode<synchronous>, transform_indices = @transform_2, window_bounds = array<i64: 1, 8, 128>}]} {
    %c0_i32 = arith.constant 0 : i32
    %0 = arith.cmpi eq, %arg0, %c0_i32 : i32
    %1 = arith.extui %0 : i1 to i32
    %c0_i32_0 = arith.constant 0 : i32
    %2 = arith.cmpi ne, %1, %c0_i32_0 : i32
    scf.if %2 {
      %cst_10 = arith.constant 0.000000e+00 : f32
      %15 = vector.broadcast %cst_10 : f32 to vector<8x128xf32>
      %c0_11 = arith.constant 0 : index
      %c0_12 = arith.constant 0 : index
      %16 = vector.load %arg4[%c0_11, %c0_12] : memref<8x128xf32, #tpu.memory_space<vmem>>, vector<8x128xf32>
      tpu.vector_store %arg4[%c0_11, %c0_12], %15 {strides = array<i32>} : memref<8x128xf32, #tpu.memory_space<vmem>>, vector<8x128xf32>,
    } else {
    }
    %c0 = arith.constant 0 : index
    %c0_1 = arith.constant 0 : index
    %3 = vector.load %arg1[%c0, %c0_1] : memref<8x128xf32, #tpu.memory_space<vmem>>, vector<8x128xf32>
    %c0_2 = arith.constant 0 : index
    %c0_3 = arith.constant 0 : index
    %4 = vector.load %arg2[%c0_2, %c0_3] : memref<8x128xf32, #tpu.memory_space<vmem>>, vector<8x128xf32>
    %5 = arith.subf %3, %4 : vector<8x128xf32>
    %6 = math.absf %5 : vector<8x128xf32>
    %c0_4 = arith.constant 0 : index
    %c0_5 = arith.constant 0 : index
    %7 = vector.load %arg4[%c0_4, %c0_5] : memref<8x128xf32, #tpu.memory_space<vmem>>, vector<8x128xf32>
    %8 = vector.shape_cast %6 : vector<8x128xf32> to vector<1x8x128xf32>
    %cst = arith.constant dense<0.000000e+00> : vector<8x128xf32>
    %9 = vector.multi_reduction <add>, %8, %cst [0] : vector<1x8x128xf32> to vector<8x128xf32>
    %10 = arith.addf %7, %9 : vector<8x128xf32>
    %c0_6 = arith.constant 0 : index
    %c0_7 = arith.constant 0 : index
    %11 = vector.load %arg4[%c0_6, %c0_7] : memref<8x128xf32, #tpu.memory_space<vmem>>, vector<8x128xf32>
    tpu.vector_store %arg4[%c0_6, %c0_7], %10 {strides = array<i32>} : memref<8x128xf32, #tpu.memory_space<vmem>>, vector<8x128xf32>,
    %c0_i32_8 = arith.constant 0 : i32
    %12 = arith.cmpi eq, %arg0, %c0_i32_8 : i32
    %13 = arith.extui %12 : i1 to i32
    %c0_i32_9 = arith.constant 0 : i32
    %14 = arith.cmpi ne, %13, %c0_i32_9 : i32
    scf.if %14 {
      %c0_10 = arith.constant 0 : index
      %c0_11 = arith.constant 0 : index
      %15 = vector.load %arg4[%c0_10, %c0_11] : memref<8x128xf32, #tpu.memory_space<vmem>>, vector<8x128xf32>
      %16 = vector.shape_cast %15 : vector<8x128xf32> to vector<1x8x128xf32>
      %c0_12 = arith.constant 0 : index
      %c0_13 = arith.constant 0 : index
      %c0_14 = arith.constant 0 : index
      %17 = vector.load %arg3[%c0_12, %c0_13, %c0_14] : memref<1x8x128xf32, #tpu.memory_space<vmem>>, vector<1x8x128xf32>
      tpu.vector_store %arg3[%c0_12, %c0_13, %c0_14], %16 {strides = array<i32>} : memref<1x8x128xf32, #tpu.memory_space<vmem>>, vector<1x8x128xf32>,
    } else {
    }
    return
  }
  func.func @transform_0(%arg0: i32) -> (i32, i32) {
    %c0_i32 = arith.constant 0 : i32
    %c0_i32_0 = arith.constant 0 : i32
    return %arg0, %c0_i32 : i32, i32
  }
  func.func @transform_1(%arg0: i32) -> (i32, i32) {
    %c0_i32 = arith.constant 0 : i32
    %c0_i32_0 = arith.constant 0 : i32
    return %arg0, %c0_i32 : i32, i32
  }
  func.func @transform_2(%arg0: i32) -> (i32, i32, i32) {
    %c0_i32 = arith.constant 0 : i32
    %c0_i32_0 = arith.constant 0 : i32
    %c0_i32_1 = arith.constant 0 : i32
    %c0_i32_2 = arith.constant 0 : i32
    return %c0_i32, %c0_i32_0, %c0_i32_1 : i32, i32, i32
  }
}

</mosaic_0001>

<llo_original>
// kernel: tpu_custom_call.1
$region0: #{tpu_custom_call.1}
  #allocation0 [shape = 'u32[]', space=smem, size = 0x4, offset = 0x4, fixed_abs, tag = 'smem constant byte address 0x4 - core index']
  #allocation1 [shape = 'u32[144,128]{1,0:T(1,128)}', space=vmem, size = 0x12000, scoped, tag = 'internal scratch']
  #allocation2 [shape = 'f32[8,128]{1,0:T(8,128)}', space=vmem, size = 0x1000, scoped, tag = 'scratch operand']
  %s0 = inlined_call_operand.hbm [shape: f32[8,128], index: 0, kind: input, shape index: {}]
  %s1 = inlined_call_operand.hbm [shape: f32[8,128], index: 1, kind: input, shape index: {}]
  %s2 = inlined_call_operand.hbm [shape: f32[1,8,128], index: 2, kind: output, shape index: {}]
  %s3 = sld [smem:[#allocation0]]
  $region34: #{tpu_custom_call.1} parent=0
    _
  %s5 = ssub.s32 1, %s3
  %s6 = scalar_select 0, %s5, %s3
  $region1: #{tpu_custom_call.1} parent=0
    #allocation3 [shape = 'u8[4096]{0}', space=vmem, size = 0x1000, scoped, tag = 'input window, operand 0, single buffered']
    #allocation4 [shape = 's32[1]{0}', space=sflag, size = 0x4, scoped, tag = 'scoped memory for tpu_custom_call.1']
    #allocation5 [shape = 's32[1]{0}', space=sflag, size = 0x4, scoped, tag = 'scoped memory for tpu_custom_call.1']
    #allocation6 [shape = 'u8[4096]{0}', space=vmem, size = 0x1000, scoped, tag = 'input window, operand 1, single buffered']
    #allocation7 [shape = 's32[1]{0}', space=sflag, size = 0x4, scoped, tag = 'scoped memory for tpu_custom_call.1']
    #allocation8 [shape = 'u8[4096]{0}', space=vmem, size = 0x1000, scoped, tag = 'output window, operand 0, single buffered']
    %7 = vsyncpa [#allocation4], 0
    %8 = vsyncpa [#allocation7], 0
    %9 = vsyncpa [#allocation5], 0
    // Predicated region
    $region2: #{tpu_custom_call.1} parent=1 // pred_check
      _
    $region3: #{tpu_custom_call.1} parent=1 // pred_check_branch
      %11 = sbr.rel (0) target = $region5
    $region4: #{tpu_custom_call.1} parent=1 // pred_region
      %s13 = ssub.s32 128, 128
      %14 = vsyncadd [#allocation4], %s13
      %s16 = sshll.u32 [#allocation3], 4
      %s17 = int_to_ptr.vmem [resolvable:$true] %s16
      %19 = dma.hbm_to_vmem [thread:$0]  %s0, 128, %s17, [#allocation4]
    $region5: #{tpu_custom_call.1} parent=1 // pred_fallthru
      _
    // Predicated region
    $region6: #{tpu_custom_call.1} parent=1 // pred_check
      _
    $region7: #{tpu_custom_call.1} parent=1 // pred_check_branch
      %21 = sbr.rel (0) target = $region9
    $region8: #{tpu_custom_call.1} parent=1 // pred_region
      %s23 = ssub.s32 128, 128
      %24 = vsyncadd [#allocation7], %s23
      %s26 = sshll.u32 [#allocation6], 4
      %s27 = int_to_ptr.vmem [resolvable:$true] %s26
      %29 = dma.hbm_to_vmem [thread:$0]  %s1, 128, %s27, [#allocation7]
    $region9: #{tpu_custom_call.1} parent=1 // pred_fallthru
      _
    // Predicated region
    $region10: #{tpu_custom_call.1} parent=1 // pred_check
      _
    $region11: #{tpu_custom_call.1} parent=1 // pred_check_branch
      %31 = sbr.rel (0) target = $region13
    $region12: #{tpu_custom_call.1} parent=1 // pred_region
      %32 = dma.done [#allocation4], 128
    $region13: #{tpu_custom_call.1} parent=1 // pred_fallthru
      _
    // Predicated region
    $region14: #{tpu_custom_call.1} parent=1 // pred_check
      _
    $region15: #{tpu_custom_call.1} parent=1 // pred_check_branch
      %34 = sbr.rel (0) target = $region17
    $region16: #{tpu_custom_call.1} parent=1 // pred_region
      %35 = dma.done [#allocation7], 128
    $region17: #{tpu_custom_call.1} parent=1 // pred_fallthru
      _
    %p36 = scmp.eq.s32.totalorder 0, 0
    // Predicated region
    $region18: #{tpu_custom_call.1} parent=1 // pred_check
      %p37 = pneg %p36
    $region19: #{tpu_custom_call.1} parent=1 // pred_check_branch
      %39 = sbr.rel (%p37) target = $region21
    $region20: #{tpu_custom_call.1} parent=1 // pred_region
      %40 = vst [vmem:[#allocation2] sm:$0xff] 0.0
    $region21: #{tpu_custom_call.1} parent=1 // pred_fallthru
      _
    %v41 = vld [vmem:[#allocation3] sm:$0xff]
    %v42 = vld [vmem:[#allocation6] sm:$0xff]
    %v43 = vsub.f32 %v41, %v42
    %v44 = vand.u32 2147483647, %v43
    %v45 = vld [vmem:[#allocation2] sm:$0xff]
    %v46 = vadd.f32 %v44, 0.0
    %v47 = vadd.f32 %v45, %v46
    %48 = vst [vmem:[#allocation2] sm:$0xff] %v47
    // Predicated region
    $region22: #{tpu_custom_call.1} parent=1 // pred_check
      %p49 = pneg %p36
    $region23: #{tpu_custom_call.1} parent=1 // pred_check_branch
      %51 = sbr.rel (%p49) target = $region25
    $region24: #{tpu_custom_call.1} parent=1 // pred_region
      %v52 = vld [vmem:[#allocation2] sm:$0xff]
      %53 = vst [vmem:[#allocation8] sm:$0xff] %v52
    $region25: #{tpu_custom_call.1} parent=1 // pred_fallthru
      _
    // Predicated region
    $region26: #{tpu_custom_call.1} parent=1 // pred_check
      _
    $region27: #{tpu_custom_call.1} parent=1 // pred_check_branch
      %55 = sbr.rel (0) target = $region29
    $region28: #{tpu_custom_call.1} parent=1 // pred_region
      %s57 = ssub.s32 128, 128
      %58 = vsyncadd [#allocation5], %s57
      %s60 = sshll.u32 [#allocation8], 4
      %s61 = int_to_ptr.vmem [resolvable:$true] %s60
      %63 = dma.vmem_to_hbm [thread:$0]  %s61, 128, %s2, [#allocation5]
    $region29: #{tpu_custom_call.1} parent=1 // pred_fallthru
      _
    // Predicated region
    $region30: #{tpu_custom_call.1} parent=1 // pred_check
      _
    $region31: #{tpu_custom_call.1} parent=1 // pred_check_branch
      %65 = sbr.rel (0) target = $region33
    $region32: #{tpu_custom_call.1} parent=1 // pred_region
      %66 = dma.done [#allocation5], 128
    $region33: #{tpu_custom_call.1} parent=1 // pred_fallthru
      _
    %67 = vsyncpa [#allocation4], 1
    %68 = vsyncpa [#allocation7], 1
    %69 = vsyncpa [#allocation5], 1

</llo_original>
